<compile_context>
chip_gen: v5e
topology: v5e:2x2
jax: 0.10.0
libtpu: 0.0.40
codegen_flags: <defaults>
</compile_context>

<pallas_src>
import functools

import jax
import jax.numpy as jnp
from jax import lax
from jax.experimental import pallas as pl
from jax.experimental.pallas import tpu as pltpu

EPS = 1e-08  # module hard-codes self.eps = 1e-08 regardless of ctor arg


# ---------------------------------------------------------------------------
# Per-generation tiling / VMEM budgets
# ---------------------------------------------------------------------------
def _budgets():
    """(target block bytes, vmem_limit_bytes) sized to the running TPU."""
    try:
        cap = int(getattr(pltpu.get_tpu_info(), "vmem_capacity_bytes", 0))
    except Exception:
        cap = 0
    if cap >= 100 * 1024 * 1024:              # v5e / v6e: 128 MiB physical VMEM
        return 8 * 1024 * 1024, 96 * 1024 * 1024
    # v7x (64 MiB physical) or unknown: stay conservative.
    return 5 * 1024 * 1024, 48 * 1024 * 1024


def _round_up(a, b):
    return (a + b - 1) // b * b


def _sublane_pack(itemsize):
    return {4: 8, 2: 16, 1: 32}.get(itemsize, 8)


def _pick_tiles(nc, hw, itemsize, target_bytes):
    """Lane-dense (row_tile, hw_tile) with row_tile*hw_tile*itemsize <= target."""
    pack = _sublane_pack(itemsize)
    # Lane tile first: as wide as possible (multiple of 128), assuming at
    # least `pack` rows fit in the budget.
    lane_budget = max(128, target_bytes // (pack * itemsize))
    hw_tile = max(128, min(_round_up(hw, 128), lane_budget) // 128 * 128)
    if hw_tile >= hw:
        hw_tile = hw                          # full dim is always a legal block dim
    # Row tile fills the remaining budget with whole sublane packs.
    rows_budget = max(pack, target_bytes // (hw_tile * itemsize))
    if rows_budget >= nc:
        row_tile = nc                         # full dim: always legal
    else:
        row_tile = max(pack, rows_budget // pack * pack)
    return row_tile, hw_tile


# ---------------------------------------------------------------------------
# Kernels
# ---------------------------------------------------------------------------
def _make_fused_kernel(n, hw):
    m = float(n * hw)
    # torch.std (ddof=1) is NaN for a single element; guard the denominator
    # (documented divergence only for the degenerate M == 1 case).
    denom = float(max(n * hw - 1, 1))

    def _fused(x_ref, w_ref, b_ref, o_ref):
        xf = x_ref[...].astype(jnp.float32)                      # (N, C, HW)
        s = jnp.sum(jnp.sum(xf, axis=2, keepdims=True), axis=0, keepdims=True)
        q = jnp.sum(jnp.sum(xf * xf, axis=2, keepdims=True), axis=0, keepdims=True)
        mean = s / m                                             # (1, C, 1)
        var = jnp.maximum((q - m * mean * mean) / denom, 0.0)    # ddof=1
        inv = 1.0 / (jnp.sqrt(var) + jnp.float32(EPS))
        scale = w_ref[...] * inv                                 # (1, C, 1) f32
        shift = b_ref[...] - mean * scale
        o_ref[...] = (xf * scale + shift).astype(o_ref.dtype)

    return _fused


def _make_stats_kernel(hw_tile, hw_total):
    needs_mask = (hw_total % hw_tile) != 0

    def _stats(x_ref, out_ref):
        t = pl.program_id(1)

        @pl.when(t == 0)
        def _():
            out_ref[...] = jnp.zeros_like(out_ref)

        xf = x_ref[...].astype(jnp.float32)                      # (rows, hw_tile)
        if needs_mask:  # ragged HW tail: zero the out-of-range lanes
            col = t * hw_tile + lax.broadcasted_iota(jnp.int32, xf.shape, 1)
            xf = jnp.where(col < hw_total, xf, 0.0)
        out_ref[:, 0:1] += jnp.sum(xf, axis=1, keepdims=True)
        out_ref[:, 1:2] += jnp.sum(xf * xf, axis=1, keepdims=True)

    return _stats


def _norm_kernel(x_ref, ss_ref, o_ref):
    # f32 math everywhere (the kernel is HBM-bound, so it is free on every
    # generation and matches the f32 reference); cast only at the store.
    scale = ss_ref[:, 0:1]                                       # (rows, 1) f32
    shift = ss_ref[:, 1:2]
    o_ref[...] = (x_ref[...].astype(jnp.float32) * scale + shift).astype(o_ref.dtype)


# ---------------------------------------------------------------------------
# Wrapper
# ---------------------------------------------------------------------------
def batch_norm_pallas(x_nchw, weight, bias, *, force_two_pass=False,
                      tile_override=None):
    """x_nchw: (N, C, H, W); weight/bias: (C,). Returns (N, C, H, W)."""
    N, C, H, W = x_nchw.shape
    HW = H * W
    NC = N * C
    M = N * HW
    itemsize = x_nchw.dtype.itemsize
    target_bytes, vmem_limit = _budgets()

    w32 = weight.astype(jnp.float32)
    b32 = bias.astype(jnp.float32)

    # ------------- fused single-pass path (x resident in VMEM) -------------
    fused_peak = N * C * HW * (2 * itemsize + 16)   # in + out + f32 temporaries
    if not force_two_pass and fused_peak <= vmem_limit:
        out3 = pl.pallas_call(
            _make_fused_kernel(N, HW),
            out_shape=jax.ShapeDtypeStruct((N, C, HW), x_nchw.dtype),
            in_specs=[pl.BlockSpec(memory_space=pltpu.MemorySpace.VMEM)] * 3,
            out_specs=pl.BlockSpec(memory_space=pltpu.MemorySpace.VMEM),
            compiler_params=pltpu.CompilerParams(vmem_limit_bytes=vmem_limit),
        )(x_nchw.reshape(N, C, HW), w32.reshape(1, C, 1), b32.reshape(1, C, 1))
        return out3.reshape(N, C, H, W)

    # ------------- two-pass streaming path ----------------------------------
    # Free view of contiguous NCHW: rows are (n, c) pairs (sublane-dense even
    # for small C), spatial on lanes (dense 128-wide loads/stores).
    x2 = x_nchw.reshape(NC, HW)
    if tile_override is not None:
        row_tile, hw_tile = tile_override
    else:
        row_tile, hw_tile = _pick_tiles(NC, HW, itemsize, target_bytes)
    grid = (pl.cdiv(NC, row_tile), pl.cdiv(HW, hw_tile))
    x_spec = pl.BlockSpec((row_tile, hw_tile), lambda r, t: (r, t))

    # Pass 1: per-(n, c)-row partial sum / sum-of-squares.  The output block is
    # the f32 accumulator (resident across the "arbitrary" hw axis); the row
    # axis is "parallel" so the stats read is sharded across TensorCores.
    partial = pl.pallas_call(
        _make_stats_kernel(hw_tile, HW),
        out_shape=jax.ShapeDtypeStruct((NC, 2), jnp.float32),
        grid_spec=pltpu.PrefetchScalarGridSpec(
            num_scalar_prefetch=0,
            grid=grid,
            in_specs=[x_spec],
            out_specs=pl.BlockSpec((row_tile, 2), lambda r, t: (r, 0)),
        ),
        compiler_params=pltpu.CompilerParams(
            dimension_semantics=("parallel", "arbitrary"),
            vmem_limit_bytes=vmem_limit,
        ),
    )(x2)

    # Tiny cross-row combine (Chan-style: centre within each row first, less
    # cancellation-prone than one global sum-of-squares), then fold mean/std
    # and the affine params into per-row scale/shift.
    # TODO(synk): for extreme N*H*W with |mean| >> std, a shifted/Welford
    # pass-1 accumulation would be more robust than f32 row sum-of-squares.
    s_rows = partial[:, 0].reshape(N, C)
    q_rows = partial[:, 1].reshape(N, C)
    hw_f = jnp.float32(HW)
    denom = jnp.float32(max(M - 1, 1))          # torch std ddof=1 (NaN-guarded)
    mean_rows = s_rows / hw_f
    m2_rows = jnp.maximum(q_rows - s_rows * mean_rows, 0.0)
    mean_c = jnp.sum(s_rows, axis=0) / jnp.float32(M)                     # (C,)
    m2_c = jnp.sum(m2_rows, axis=0) + hw_f * jnp.sum((mean_rows - mean_c) ** 2, axis=0)
    std_c = jnp.sqrt(jnp.maximum(m2_c / denom, 0.0))
    scale_c = w32 * (1.0 / (std_c + jnp.float32(EPS)))
    shift_c = b32 - mean_c * scale_c
    ss = jnp.stack([jnp.tile(scale_c, N), jnp.tile(shift_c, N)], axis=1)  # (NC, 2)

    # Pass 2: streaming normalize, fully parallel tiles; ragged tails handled
    # by the clipped last-block store.
    out2 = pl.pallas_call(
        _norm_kernel,
        out_shape=jax.ShapeDtypeStruct((NC, HW), x_nchw.dtype),
        grid_spec=pltpu.PrefetchScalarGridSpec(
            num_scalar_prefetch=0,
            grid=grid,
            in_specs=[x_spec, pl.BlockSpec((row_tile, 2), lambda r, t: (r, 0))],
            out_specs=x_spec,
        ),
        compiler_params=pltpu.CompilerParams(
            dimension_semantics=("parallel", "parallel"),
            vmem_limit_bytes=vmem_limit,
        ),
    )(x2, ss)
    return out2.reshape(N, C, H, W)


# ---------------------------------------------------------------------------
# Reference + self-test
# ---------------------------------------------------------------------------
def batch_norm_ref(x, weight, bias):
    """Pure-JAX reference matching the PyTorch module (dim=1, affine=True)."""
    mean = jnp.mean(x, axis=(0, 2, 3), keepdims=True)
    std = jnp.sqrt(jnp.var(x, axis=(0, 2, 3), keepdims=True, ddof=1))
    y = (x - mean) / (std + EPS)
    return y * weight.reshape(1, -1, 1, 1) + bias.reshape(1, -1, 1, 1)


if __name__ == "__main__":
    key = jax.random.PRNGKey(0)
    kx, kw, kb, kx2 = jax.random.split(key, 4)

    N, C, H, W = 2, 4, 16, 16   # NCHW input, as the module's forward implies
    x = jax.random.normal(kx, (N, C, H, W), dtype=jnp.float32)
    # module leaves affine params uninitialized; use deterministic randoms
    weight = jax.random.normal(kw, (C,), dtype=jnp.float32)
    bias = jax.random.normal(kb, (C,), dtype=jnp.float32)
    ref = batch_norm_ref(x, weight, bias)

    # 1) fused single-pass path (small tensor, VMEM resident)
    fused = jax.jit(batch_norm_pallas)
    out = jax.block_until_ready(fused(x, weight, bias))
    assert out.shape == (N, C, H, W)
    assert jnp.allclose(out, ref, atol=1e-4, rtol=1e-4), "fused path mismatch"

    # 2) two-pass streaming path on the same input
    two_pass = jax.jit(functools.partial(batch_norm_pallas, force_two_pass=True))
    out = jax.block_until_ready(two_pass(x, weight, bias))
    assert jnp.allclose(out, ref, atol=1e-4, rtol=1e-4), "two-pass path mismatch"

    # 3) two-pass path with a forced small tile: exercises multi-step grid
    #    accumulation and the ragged-HW column mask (HW = 320, hw_tile = 128).
    Hr, Wr = 16, 20
    xr = jax.random.normal(kx2, (N, C, Hr, Wr), dtype=jnp.float32)
    refr = batch_norm_ref(xr, weight, bias)
    tiled = jax.jit(functools.partial(batch_norm_pallas, force_two_pass=True,
                                      tile_override=(8, 128)))
    outr = jax.block_until_ready(tiled(xr, weight, bias))
    assert jnp.allclose(outr, refr, atol=1e-4, rtol=1e-4), "ragged-tile path mismatch"

    print("KERNEL_OK")
</pallas_src>

<mosaic_0001>
module attributes {stable_mosaic.version = 11 : i64} {
  func.func @_fused(%arg0: memref<2x4x256xf32, #tpu.memory_space<vmem>>, %arg1: memref<1x4x1xf32, #tpu.memory_space<vmem>>, %arg2: memref<1x4x1xf32, #tpu.memory_space<vmem>>, %arg3: memref<2x4x256xf32, #tpu.memory_space<vmem>>) attributes {dimension_semantics = [], scalar_prefetch = 0 : i64, scratch_operands = 0 : i64, tpu.core_type = #tpu.core_type<tc>} {
    %c0 = arith.constant 0 : index
    %c0_0 = arith.constant 0 : index
    %c0_1 = arith.constant 0 : index
    %0 = vector.load %arg0[%c0, %c0_0, %c0_1] : memref<2x4x256xf32, #tpu.memory_space<vmem>>, vector<2x4x256xf32>
    %cst = arith.constant dense<0.000000e+00> : vector<2x4xf32>
    %1 = vector.multi_reduction <add>, %0, %cst [2] : vector<2x4x256xf32> to vector<2x4xf32>
    %2 = vector.shape_cast %1 : vector<2x4xf32> to vector<2x4x1xf32>
    %cst_2 = arith.constant dense<0.000000e+00> : vector<4x1xf32>
    %3 = vector.multi_reduction <add>, %2, %cst_2 [0] : vector<2x4x1xf32> to vector<4x1xf32>
    %4 = vector.shape_cast %3 : vector<4x1xf32> to vector<1x4x1xf32>
    %5 = arith.mulf %0, %0 : vector<2x4x256xf32>
    %cst_3 = arith.constant dense<0.000000e+00> : vector<2x4xf32>
    %6 = vector.multi_reduction <add>, %5, %cst_3 [2] : vector<2x4x256xf32> to vector<2x4xf32>
    %7 = vector.shape_cast %6 : vector<2x4xf32> to vector<2x4x1xf32>
    %cst_4 = arith.constant dense<0.000000e+00> : vector<4x1xf32>
    %8 = vector.multi_reduction <add>, %7, %cst_4 [0] : vector<2x4x1xf32> to vector<4x1xf32>
    %9 = vector.shape_cast %8 : vector<4x1xf32> to vector<1x4x1xf32>
    %cst_5 = arith.constant 5.120000e+02 : f32
    %10 = vector.broadcast %cst_5 : f32 to vector<1x4x1xf32>
    %11 = arith.divf %4, %10 : vector<1x4x1xf32>
    %cst_6 = arith.constant 5.120000e+02 : f32
    %12 = vector.broadcast %cst_6 : f32 to vector<1x4x1xf32>
    %13 = arith.mulf %12, %11 : vector<1x4x1xf32>
    %14 = arith.mulf %13, %11 : vector<1x4x1xf32>
    %15 = arith.subf %9, %14 : vector<1x4x1xf32>
    %cst_7 = arith.constant 5.110000e+02 : f32
    %16 = vector.broadcast %cst_7 : f32 to vector<1x4x1xf32>
    %17 = arith.divf %15, %16 : vector<1x4x1xf32>
    %cst_8 = arith.constant 0.000000e+00 : f32
    %18 = vector.broadcast %cst_8 : f32 to vector<1x4x1xf32>
    %19 = arith.maximumf %17, %18 : vector<1x4x1xf32>
    %20 = math.sqrt %19 : vector<1x4x1xf32>
    %cst_9 = arith.constant 9.99999993E-9 : f32
    %21 = vector.broadcast %cst_9 : f32 to vector<1x4x1xf32>
    %22 = arith.addf %20, %21 : vector<1x4x1xf32>
    %cst_10 = arith.constant 1.000000e+00 : f32
    %23 = vector.broadcast %cst_10 : f32 to vector<1x4x1xf32>
    %24 = arith.divf %23, %22 : vector<1x4x1xf32>
    %c0_11 = arith.constant 0 : index
    %c0_12 = arith.constant 0 : index
    %c0_13 = arith.constant 0 : index
    %25 = vector.load %arg1[%c0_11, %c0_12, %c0_13] : memref<1x4x1xf32, #tpu.memory_space<vmem>>, vector<1x4x1xf32>
    %26 = arith.mulf %25, %24 : vector<1x4x1xf32>
    %c0_14 = arith.constant 0 : index
    %c0_15 = arith.constant 0 : index
    %c0_16 = arith.constant 0 : index
    %27 = vector.load %arg2[%c0_14, %c0_15, %c0_16] : memref<1x4x1xf32, #tpu.memory_space<vmem>>, vector<1x4x1xf32>
    %28 = arith.mulf %11, %26 : vector<1x4x1xf32>
    %29 = arith.subf %27, %28 : vector<1x4x1xf32>
    %30 = vector.broadcast %26 : vector<1x4x1xf32> to vector<2x4x256xf32>
    %31 = arith.mulf %0, %30 : vector<2x4x256xf32>
    %32 = vector.broadcast %29 : vector<1x4x1xf32> to vector<2x4x256xf32>
    %33 = arith.addf %31, %32 : vector<2x4x256xf32>
    %c0_17 = arith.constant 0 : index
    %c0_18 = arith.constant 0 : index
    %c0_19 = arith.constant 0 : index
    %34 = vector.load %arg3[%c0_17, %c0_18, %c0_19] : memref<2x4x256xf32, #tpu.memory_space<vmem>>, vector<2x4x256xf32>
    tpu.vector_store %arg3[%c0_17, %c0_18, %c0_19], %33 {strides = array<i32>} : memref<2x4x256xf32, #tpu.memory_space<vmem>>, vector<2x4x256xf32>,
    return
  }
}

</mosaic_0001>

<llo_original>
// kernel: batch_norm_pallas.1
$region0: #{batch_norm_pallas.1}
  #allocation0 [shape = 'u32[]', space=smem, size = 0x4, offset = 0x4, fixed_abs, tag = 'smem constant byte address 0x4 - core index']
  #allocation1 [shape = 'u32[72,128]{1,0:T(1,128)}', space=vmem, size = 0x9000, scoped, tag = 'internal scratch']
  %s0 = inlined_call_operand.vmem [shape: f32[2,4,256], index: 0, kind: input, shape index: {}]
  %s1 = inlined_call_operand.vmem [shape: f32[1,4,1], index: 1, kind: input, shape index: {}]
  %s2 = inlined_call_operand.vmem [shape: f32[1,4,1], index: 2, kind: input, shape index: {}]
  %s3 = inlined_call_operand.vmem [shape: f32[2,4,256], index: 3, kind: output, shape index: {}]
  %s4 = sld [smem:[#allocation0]]
  $region22: #{batch_norm_pallas.1} parent=0
    _
  %s6 = ssub.s32 1, %s4
  %s7 = scalar_select 0, %s6, %s4
  // Predicated region
  $region2: #{batch_norm_pallas.1} parent=0 // pred_check
    _
  $region3: #{batch_norm_pallas.1} parent=0 // pred_check_branch
    %9 = sbr.rel (0) target = $region5
  $region4: #{batch_norm_pallas.1} parent=0 // pred_region
    _
  $region5: #{batch_norm_pallas.1} parent=0 // pred_fallthru
    _
  // Predicated region
  $region6: #{batch_norm_pallas.1} parent=0 // pred_check
    _
  $region7: #{batch_norm_pallas.1} parent=0 // pred_check_branch
    %11 = sbr.rel (0) target = $region9
  $region8: #{batch_norm_pallas.1} parent=0 // pred_region
    _
  $region9: #{batch_norm_pallas.1} parent=0 // pred_fallthru
    _
  // Predicated region
  $region10: #{batch_norm_pallas.1} parent=0 // pred_check
    _
  $region11: #{batch_norm_pallas.1} parent=0 // pred_check_branch
    %13 = sbr.rel (0) target = $region13
  $region12: #{batch_norm_pallas.1} parent=0 // pred_region
    _
  $region13: #{batch_norm_pallas.1} parent=0 // pred_fallthru
    _
  %v14 = vld [vmem:[%s0] sm:$0xff]
  %v15 = vld [vmem:[%s0 + $0x8] sm:$0xff]
  %18 = vst [vmem:[#allocation1] ss:$2 sm:$0xff] %v14
  %v19 = vld.sshfl [vmem:[#allocation1] sm:$0xff pattern:$0x75316420]
  %v20 = vld.sshfl [vmem:[#allocation1 + $0x8] sm:$0xff pattern:$0x75316420]
  %s21 = scalar_lea.vmem [#allocation1], 16
  %22 = vst [vmem:[%s21] ss:$2 sm:$0xff] %v15
  %v23 = vld.sshfl [vmem:[#allocation1 + $0x10] sm:$0xff pattern:$0x75316420]
  %v24 = vld.sshfl [vmem:[#allocation1 + $0x18] sm:$0xff pattern:$0x75316420]
  %vm29 = vcmask 1043456
  %v30 = vsel %vm29, %v19, 0.0
  %v31 = vsel %vm29, %v20, 0.0
  %v32 = vadd.f32 %v30, %v31
  %33 = vadd.xlane.f32.xlu0 %v32
  %v34 = vpop.xlane.xlu0 %33
  %v35 = vsel %vm29, %v23, 0.0
  %v36 = vsel %vm29, %v24, 0.0
  %v37 = vadd.f32 %v35, %v36
  %38 = vadd.xlane.f32.xlu0 %v37
  %v39 = vpop.xlane.xlu0 %38
  %v40 = vsel %vm29, %v34, 0.0
  %v41 = vsel %vm29, %v39, 0.0
  %v42 = vadd.f32 %v40, %v41
  %v43 = vmul.f32 %v14, %v14
  %v44 = vmul.f32 %v15, %v15
  %47 = vst [vmem:[#allocation1] ss:$2 sm:$0xff] %v43
  %v48 = vld.sshfl [vmem:[#allocation1] sm:$0xff pattern:$0x75316420]
  %v49 = vld.sshfl [vmem:[#allocation1 + $0x8] sm:$0xff pattern:$0x75316420]
  %s50 = scalar_lea.vmem [#allocation1], 16
  %51 = vst [vmem:[%s50] ss:$2 sm:$0xff] %v44
  %v52 = vld.sshfl [vmem:[#allocation1 + $0x10] sm:$0xff pattern:$0x75316420]
  %v53 = vld.sshfl [vmem:[#allocation1 + $0x18] sm:$0xff pattern:$0x75316420]
  %v58 = vsel %vm29, %v48, 0.0
  %v59 = vsel %vm29, %v49, 0.0
  %v60 = vadd.f32 %v58, %v59
  %61 = vadd.xlane.f32.xlu0 %v60
  %v62 = vpop.xlane.xlu0 %61
  %v63 = vsel %vm29, %v52, 0.0
  %v64 = vsel %vm29, %v53, 0.0
  %v65 = vadd.f32 %v63, %v64
  %66 = vadd.xlane.f32.xlu0 %v65
  %v67 = vpop.xlane.xlu0 %66
  %v68 = vsel %vm29, %v62, 0.0
  %v69 = vsel %vm29, %v67, 0.0
  %v70 = vadd.f32 %v68, %v69
  %v71 = vrcp.pop 512.0
  %v72 = vmul.f32 512.0, %v71
  %v73 = vsub.f32 1.0, %v72
  %v74 = vmul.f32 %v71, %v73
  %v75 = vadd.f32 %v71, %v74
  %vm76 = vweird.f32 %v71
  %v77 = vsel %vm76, %v71, %v75
  %v78 = vmul.f32 %v42, %v77
  %v79 = vmul.f32 %v78, 512.0
  %v80 = vmul.f32 %v79, %v78
  %v81 = vsub.f32 %v70, %v80
  %v82 = vrcp.pop 511.0
  %v83 = vmul.f32 511.0, %v82
  %v84 = vsub.f32 1.0, %v83
  %v85 = vmul.f32 %v82, %v84
  %v86 = vadd.f32 %v82, %v85
  %vm87 = vweird.f32 %v82
  %v88 = vsel %vm87, %v82, %v86
  %v89 = vmul.f32 %v81, %v88
  %v90 = vmax.f32 %v89, 0.0
  %v91 = vrsqrt.pop %v90
  %v92 = vmul.f32 %v91, %v90
  %v93 = vmul.f32 %v92, %v91
  %v94 = vmul.f32 0.5, %v93
  %v95 = vsub.f32 1.5, %v94
  %v96 = vmul.f32 %v91, %v95
  %v97 = vmul.f32 %v90, %v96
  %vm98 = vcmp.eq.f32.partialorder %v90, inf
  %v99 = vsel %vm98, %v90, %v97
  %vm100 = vcmp.eq.f32.partialorder %v90, 0.0
  %v101 = vand.u32 %v90, 2147483648
  %v102 = vsel %vm100, %v101, %v99
  %v103 = vadd.f32 %v102, 1e-08
  %v104 = vrcp.pop %v103
  %v105 = vmul.f32 %v103, %v104
  %v106 = vsub.f32 1.0, %v105
  %v107 = vmul.f32 %v104, %v106
  %v108 = vadd.f32 %v104, %v107
  %vm109 = vweird.f32 %v103
  %vm110 = vweird.f32 %v104
  %vm111 = vmor %vm109, %vm110
  %v112 = vsel %vm111, %v104, %v108
  %v113 = vand.u32 2147483647, %v103
  %vm114 = vcmp.eq.f32.partialorder %v113, 8.507059e+37
  %v115 = vand.u32 %v103, 2147483648
  %v116 = vor.u32 1.1754944e-38, %v115
  %v117 = vsel %vm114, %v116, %v112
  %v118 = vmul.f32 1.0, %v117
  %v119 = vld [vmem:[%s1] sm:$0xf]
  %v120 = vmul.f32 %v119, %v118
  %v121 = vld [vmem:[%s2] sm:$0xf]
  %v122 = vmul.f32 %v78, %v120
  %v123 = vsub.f32 %v121, %v122
  %125 = vset.pattern.permute.xlu0 0
  %126 = vperm.xlu0 %125, %v120
  %v127 = vpop.permute.xlu0 %126
  %v129 = vunpack.c.l.s4 839922192
  %v130 = vunpack.c.0.s8 %v129
  %v131 = vperm.slane %v127, %v130
  %v133 = vmul.f32 %v14, %v131
  %v134 = vmul.f32 %v15, %v131
  %136 = vset.pattern.permute.xlu0 0
  %137 = vperm.xlu0 %136, %v123
  %v138 = vpop.permute.xlu0 %137
  %v140 = vunpack.c.l.s4 839922192
  %v141 = vunpack.c.0.s8 %v140
  %v142 = vperm.slane %v138, %v141
  %v144 = vadd.f32 %v133, %v142
  %v145 = vadd.f32 %v134, %v142
  %146 = vst [vmem:[%s3] sm:$0xff] %v144
  %147 = vst [vmem:[%s3 + $0x8] sm:$0xff] %v145
  // Predicated region
  $region14: #{batch_norm_pallas.1} parent=0 // pred_check
    _
  $region15: #{batch_norm_pallas.1} parent=0 // pred_check_branch
    %149 = sbr.rel (0) target = $region17
  $region16: #{batch_norm_pallas.1} parent=0 // pred_region
    _
  $region17: #{batch_norm_pallas.1} parent=0 // pred_fallthru
    _
  // Predicated region
  $region18: #{batch_norm_pallas.1} parent=0 // pred_check
    _
  $region19: #{batch_norm_pallas.1} parent=0 // pred_check_branch
    %151 = sbr.rel (0) target = $region21
  $region20: #{batch_norm_pallas.1} parent=0 // pred_region
    _
  $region21: #{batch_norm_pallas.1} parent=0 // pred_fallthru
    _

</llo_original>
